<compile_context>
chip_gen: v6e
topology: v6e:2x2x1
jax: 0.10.0
libtpu: 0.0.40
codegen_flags: <defaults>
</compile_context>

<pallas_src>
import math

import jax
import jax.numpy as jnp
from jax.experimental import pallas as pl
from jax.experimental.pallas import tpu as pltpu


def _round_up(x, m):
    return (x + m - 1) // m * m


# ---------------------------------------------------------------------------
# Kernels
# ---------------------------------------------------------------------------

def _noisy_linear_kernel(x_ref, wmu_ref, wsig_ref, eo_ref, b_ref, o_ref, acc_ref):
    k = pl.program_id(2)

    @pl.when(k == 0)
    def _():
        acc_ref[...] = jnp.zeros_like(acc_ref)

    # Noisy-weight tile (TK, TN) rebuilt on the VPU in bf16:
    #   w = weight_mu + (weight_sigma * eps_in)[folded at prepare] * eps_out
    # eo_ref is (1, TN): a cheap sublane broadcast, no cross-lane work.
    w = wmu_ref[...] + wsig_ref[...] * eo_ref[...]

    # Canonical (TM,TK) @ (TK,TN) bf16 contraction on the MXU, f32 accumulate.
    acc_ref[...] += jnp.dot(x_ref[...], w, preferred_element_type=jnp.float32)

    @pl.when(k == pl.num_programs(2) - 1)
    def _():
        o_ref[...] = (acc_ref[...] + b_ref[...]).astype(o_ref.dtype)


def _eval_linear_kernel(x_ref, wmu_ref, b_ref, o_ref, acc_ref):
    k = pl.program_id(2)

    @pl.when(k == 0)
    def _():
        acc_ref[...] = jnp.zeros_like(acc_ref)

    acc_ref[...] += jnp.dot(x_ref[...], wmu_ref[...],
                            preferred_element_type=jnp.float32)

    @pl.when(k == pl.num_programs(2) - 1)
    def _():
        o_ref[...] = (acc_ref[...] + b_ref[...]).astype(o_ref.dtype)


# ---------------------------------------------------------------------------
# One-time (per noise draw / param update) preparation: pad + transpose + cast.
# Never done per forward call.
# ---------------------------------------------------------------------------

def prepare_noisy_params(params, *, tn=512, tk=1024, weight_dtype=jnp.bfloat16):
    out_f, in_f = params["weight_mu"].shape
    TN = min(tn, _round_up(out_f, 128))
    TK = min(tk, _round_up(in_f, 128))
    Np = _round_up(out_f, TN)
    Kp = _round_up(in_f, TK)

    def pad2(a, rows, cols):
        pr, pc = rows - a.shape[0], cols - a.shape[1]
        if pr == 0 and pc == 0:
            return a
        return jnp.pad(a, ((0, pr), (0, pc)))

    # Pre-transpose to (in, out) so the kernel's contraction is canonical
    # (no in-kernel weight relayout), pad K/N edges with zeros once, cast bf16.
    wmu_t = pad2(params["weight_mu"].T.astype(weight_dtype), Kp, Np)
    # Fold eps_in into sigma in f32, then cast (VPU-friendly on v5e too).
    wsig_ei_t = pad2(
        (params["weight_sigma"] * params["eps_in"][None, :]).T.astype(weight_dtype),
        Kp, Np)
    eo_row = pad2(params["eps_out"].reshape(1, out_f).astype(weight_dtype), 1, Np)
    # Biases folded to a single f32 row each (added to the f32 accumulator).
    bias_noisy = pad2(
        (params["bias_mu"] + params["bias_sigma"] * params["eps_out"])
        .reshape(1, out_f).astype(jnp.float32), 1, Np)
    bias_mu = pad2(params["bias_mu"].reshape(1, out_f).astype(jnp.float32), 1, Np)

    return {
        "wmu_t": wmu_t, "wsig_ei_t": wsig_ei_t, "eo_row": eo_row,
        "bias_noisy": bias_noisy, "bias_mu": bias_mu,
        "in_features": in_f, "out_features": out_f,
        "TN": TN, "TK": TK, "Np": Np, "Kp": Kp,
    }


# ---------------------------------------------------------------------------
# Forward wrapper
# ---------------------------------------------------------------------------

def noisy_linear_forward(x, prepared, training=True, *, tm=128):
    """Forward matching torch NoisyLinear.forward (training / eval modes)."""
    B, in_f = x.shape
    assert in_f == prepared["in_features"]
    out_f = prepared["out_features"]
    TN, TK = prepared["TN"], prepared["TK"]
    Np, Kp = prepared["Np"], prepared["Kp"]

    TM = min(tm, _round_up(B, 8))
    Bp = _round_up(B, TM)

    # Cast activations to bf16 for the MXU; pad only if needed.
    xb = x.astype(jnp.bfloat16)
    if (Bp, Kp) != (B, in_f):
        xb = jnp.pad(xb, ((0, Bp - B), (0, Kp - in_f)))

    grid = (Bp // TM, Np // TN, Kp // TK)

    x_spec = pl.BlockSpec((TM, TK), lambda i, j, k: (i, k))
    w_spec = pl.BlockSpec((TK, TN), lambda i, j, k: (k, j))
    # K- and M-independent rows: the block is reused across the K loop and M
    # tiles, not re-DMAed.
    n_spec = pl.BlockSpec((1, TN), lambda i, j, k: (0, j))
    o_spec = pl.BlockSpec((TM, TN), lambda i, j, k: (i, j))

    out_shape = jax.ShapeDtypeStruct((Bp, Np), jnp.float32)
    cparams = pltpu.CompilerParams(
        dimension_semantics=("parallel", "parallel", "arbitrary"))
    scratch = [pltpu.VMEM((TM, TN), jnp.float32)]

    n_w_streams = 2 if training else 1
    cost = pl.CostEstimate(
        flops=2 * Bp * Kp * Np,
        transcendentals=0,
        bytes_accessed=(Bp * Kp * 2 + n_w_streams * Kp * Np * 2
                        + Np * 2 + Np * 4 + Bp * Np * 4),
    )

    if training:
        yp = pl.pallas_call(
            _noisy_linear_kernel,
            out_shape=out_shape,
            grid=grid,
            in_specs=[x_spec, w_spec, w_spec, n_spec, n_spec],
            out_specs=o_spec,
            scratch_shapes=scratch,
            compiler_params=cparams,
            cost_estimate=cost,
        )(xb, prepared["wmu_t"], prepared["wsig_ei_t"], prepared["eo_row"],
          prepared["bias_noisy"])
    else:
        yp = pl.pallas_call(
            _eval_linear_kernel,
            out_shape=out_shape,
            grid=grid,
            in_specs=[x_spec, w_spec, n_spec],
            out_specs=o_spec,
            scratch_shapes=scratch,
            compiler_params=cparams,
            cost_estimate=cost,
        )(xb, prepared["wmu_t"], prepared["bias_mu"])

    if (Bp, Np) == (B, out_f):
        return yp
    return yp[:B, :out_f]


# ---------------------------------------------------------------------------
# Init glue (plain JAX) — mirrors reset_parameters() + reset_noise()
# ---------------------------------------------------------------------------

def _scale_noise(key, size):
    v = jax.random.normal(key, (size,), dtype=jnp.float32)
    return jnp.sign(v) * jnp.sqrt(jnp.abs(v))


def init_noisy_linear(key, in_features, out_features, std_init=0.5):
    # NOTE: the reference module hardcodes 0.5 * mu_range for both sigmas
    # (std_init is unused in its reset_parameters); we match that exactly.
    del std_init
    k_wmu, k_bmu, k_ein, k_eout = jax.random.split(key, 4)
    mu_range = 1.0 / math.sqrt(in_features)

    weight_mu = jax.random.uniform(
        k_wmu, (out_features, in_features), jnp.float32,
        minval=-mu_range, maxval=mu_range)
    weight_sigma = jnp.full((out_features, in_features), 0.5 * mu_range,
                            jnp.float32)
    bias_mu = jax.random.uniform(
        k_bmu, (out_features,), jnp.float32, minval=-mu_range, maxval=mu_range)
    bias_sigma = jnp.full((out_features,), 0.5 * mu_range, jnp.float32)

    # Factorized Gaussian noise kept in factor form (eps_w = eps_out ⊗ eps_in,
    # eps_b = eps_out); the dense (out, in) epsilon is never materialized.
    eps_in = _scale_noise(k_ein, in_features)
    eps_out = _scale_noise(k_eout, out_features)

    return {
        "weight_mu": weight_mu,
        "weight_sigma": weight_sigma,
        "bias_mu": bias_mu,
        "bias_sigma": bias_sigma,
        "eps_in": eps_in,
        "eps_out": eps_out,
    }


# ---------------------------------------------------------------------------
# Demo / correctness check
# ---------------------------------------------------------------------------

if __name__ == "__main__":
    key = jax.random.PRNGKey(0)
    k_param, k_x = jax.random.split(key)

    in_features, out_features, batch = 32, 16, 8
    params = init_noisy_linear(k_param, in_features, out_features)
    prepared = prepare_noisy_params(params)
    x = jax.random.normal(k_x, (batch, in_features), dtype=jnp.float32)

    # Training-mode forward (noisy weights), as after reset_noise() in torch.
    y = jax.block_until_ready(noisy_linear_forward(x, prepared, training=True))

    # Pure-JAX f32 reference (kernel runs the matmul in bf16 -> loose tolerance).
    w_eps = jnp.outer(params["eps_out"], params["eps_in"])
    w_ref = params["weight_mu"] + params["weight_sigma"] * w_eps
    b_ref = params["bias_mu"] + params["bias_sigma"] * params["eps_out"]
    y_ref = x @ w_ref.T + b_ref
    assert jnp.allclose(y, y_ref, atol=2e-2, rtol=2e-2), "training-mode mismatch"

    # Eval-mode forward (mu-only weights).
    y_eval = jax.block_until_ready(
        noisy_linear_forward(x, prepared, training=False))
    y_eval_ref = x @ params["weight_mu"].T + params["bias_mu"]
    assert jnp.allclose(y_eval, y_eval_ref, atol=2e-2, rtol=2e-2), "eval mismatch"

    print("KERNEL_OK")
</pallas_src>

<mosaic_0001>
module attributes {stable_mosaic.version = 11 : i64} {
  func.func @_noisy_linear_kernel(%arg0: i32, %arg1: i32, %arg2: i32, %arg3: memref<8x128xbf16, #tpu.memory_space<vmem>>, %arg4: memref<128x128xbf16, #tpu.memory_space<vmem>>, %arg5: memref<128x128xbf16, #tpu.memory_space<vmem>>, %arg6: memref<1x128xbf16, #tpu.memory_space<vmem>>, %arg7: memref<1x128xf32, #tpu.memory_space<vmem>>, %arg8: memref<8x128xf32, #tpu.memory_space<vmem>>, %arg9: memref<8x128xf32, #tpu.memory_space<vmem>>) attributes {dimension_semantics = [#tpu.dimension_semantics<parallel>, #tpu.dimension_semantics<parallel>, #tpu.dimension_semantics<arbitrary>], iteration_bounds = array<i64: 1, 1, 1>, scalar_prefetch = 0 : i64, scratch_operands = 1 : i64, tpu.core_type = #tpu.core_type<tc>, window_params = [{transform_indices = @transform_0, window_bounds = array<i64: 8, 128>}, {transform_indices = @transform_1, window_bounds = array<i64: 128, 128>}, {transform_indices = @transform_2, window_bounds = array<i64: 128, 128>}, {transform_indices = @transform_3, window_bounds = array<i64: 1, 128>}, {transform_indices = @transform_4, window_bounds = array<i64: 1, 128>}, {transform_indices = @transform_5, window_bounds = array<i64: 8, 128>}]} {
    %c0_i32 = arith.constant 0 : i32
    %0 = arith.cmpi eq, %arg2, %c0_i32 : i32
    %1 = arith.extui %0 : i1 to i32
    %c0_i32_0 = arith.constant 0 : i32
    %2 = arith.cmpi ne, %1, %c0_i32_0 : i32
    scf.if %2 {
      %cst_14 = arith.constant 0.000000e+00 : f32
      %17 = vector.broadcast %cst_14 : f32 to vector<8x128xf32>
      %c0_15 = arith.constant 0 : index
      %c0_16 = arith.constant 0 : index
      %18 = vector.load %arg9[%c0_15, %c0_16] : memref<8x128xf32, #tpu.memory_space<vmem>>, vector<8x128xf32>
      tpu.vector_store %arg9[%c0_15, %c0_16], %17 {strides = array<i32>} : memref<8x128xf32, #tpu.memory_space<vmem>>, vector<8x128xf32>,
    } else {
    }
    %c0 = arith.constant 0 : index
    %c0_1 = arith.constant 0 : index
    %3 = vector.load %arg4[%c0, %c0_1] : memref<128x128xbf16, #tpu.memory_space<vmem>>, vector<128x128xbf16>
    %c0_2 = arith.constant 0 : index
    %c0_3 = arith.constant 0 : index
    %4 = vector.load %arg5[%c0_2, %c0_3] : memref<128x128xbf16, #tpu.memory_space<vmem>>, vector<128x128xbf16>
    %c0_4 = arith.constant 0 : index
    %c0_5 = arith.constant 0 : index
    %5 = vector.load %arg6[%c0_4, %c0_5] : memref<1x128xbf16, #tpu.memory_space<vmem>>, vector<1x128xbf16>
    %6 = vector.broadcast %5 : vector<1x128xbf16> to vector<128x128xbf16>
    %7 = arith.mulf %4, %6 : vector<128x128xbf16>
    %8 = arith.addf %3, %7 : vector<128x128xbf16>
    %c0_6 = arith.constant 0 : index
    %c0_7 = arith.constant 0 : index
    %9 = vector.load %arg9[%c0_6, %c0_7] : memref<8x128xf32, #tpu.memory_space<vmem>>, vector<8x128xf32>
    %c0_8 = arith.constant 0 : index
    %c0_9 = arith.constant 0 : index
    %10 = vector.load %arg3[%c0_8, %c0_9] : memref<8x128xbf16, #tpu.memory_space<vmem>>, vector<8x128xbf16>
    %cst = arith.constant dense<0.000000e+00> : vector<8x128xf32>
    %11 = tpu.matmul %10, %8, %cst {dimension_numbers = #tpu.dot_dimension_numbers<[1], [0], [0], [1], [0, 0, 1, 1], [], []>} : vector<8x128xbf16>, vector<128x128xbf16>, vector<8x128xf32> -> vector<8x128xf32>
    %12 = arith.addf %9, %11 : vector<8x128xf32>
    %c0_10 = arith.constant 0 : index
    %c0_11 = arith.constant 0 : index
    %13 = vector.load %arg9[%c0_10, %c0_11] : memref<8x128xf32, #tpu.memory_space<vmem>>, vector<8x128xf32>
    tpu.vector_store %arg9[%c0_10, %c0_11], %12 {strides = array<i32>} : memref<8x128xf32, #tpu.memory_space<vmem>>, vector<8x128xf32>,
    %c0_i32_12 = arith.constant 0 : i32
    %14 = arith.cmpi eq, %arg2, %c0_i32_12 : i32
    %15 = arith.extui %14 : i1 to i32
    %c0_i32_13 = arith.constant 0 : i32
    %16 = arith.cmpi ne, %15, %c0_i32_13 : i32
    scf.if %16 {
      %c0_14 = arith.constant 0 : index
      %c0_15 = arith.constant 0 : index
      %17 = vector.load %arg9[%c0_14, %c0_15] : memref<8x128xf32, #tpu.memory_space<vmem>>, vector<8x128xf32>
      %c0_16 = arith.constant 0 : index
      %c0_17 = arith.constant 0 : index
      %18 = vector.load %arg7[%c0_16, %c0_17] : memref<1x128xf32, #tpu.memory_space<vmem>>, vector<1x128xf32>
      %19 = vector.broadcast %18 : vector<1x128xf32> to vector<8x128xf32>
      %20 = arith.addf %17, %19 : vector<8x128xf32>
      %c0_18 = arith.constant 0 : index
      %c0_19 = arith.constant 0 : index
      %21 = vector.load %arg8[%c0_18, %c0_19] : memref<8x128xf32, #tpu.memory_space<vmem>>, vector<8x128xf32>
      tpu.vector_store %arg8[%c0_18, %c0_19], %20 {strides = array<i32>} : memref<8x128xf32, #tpu.memory_space<vmem>>, vector<8x128xf32>,
    } else {
    }
    return
  }
  func.func @transform_0(%arg0: i32, %arg1: i32, %arg2: i32) -> (i32, i32) {
    %c0_i32 = arith.constant 0 : i32
    return %arg0, %arg2 : i32, i32
  }
  func.func @transform_1(%arg0: i32, %arg1: i32, %arg2: i32) -> (i32, i32) {
    %c0_i32 = arith.constant 0 : i32
    return %arg2, %arg1 : i32, i32
  }
  func.func @transform_2(%arg0: i32, %arg1: i32, %arg2: i32) -> (i32, i32) {
    %c0_i32 = arith.constant 0 : i32
    return %arg2, %arg1 : i32, i32
  }
  func.func @transform_3(%arg0: i32, %arg1: i32, %arg2: i32) -> (i32, i32) {
    %c0_i32 = arith.constant 0 : i32
    %c0_i32_0 = arith.constant 0 : i32
    return %c0_i32, %arg1 : i32, i32
  }
  func.func @transform_4(%arg0: i32, %arg1: i32, %arg2: i32) -> (i32, i32) {
    %c0_i32 = arith.constant 0 : i32
    %c0_i32_0 = arith.constant 0 : i32
    return %c0_i32, %arg1 : i32, i32
  }
  func.func @transform_5(%arg0: i32, %arg1: i32, %arg2: i32) -> (i32, i32) {
    %c0_i32 = arith.constant 0 : i32
    return %arg0, %arg1 : i32, i32
  }
}

</mosaic_0001>

<llo_original>
// kernel: tpu_custom_call.1
$region0: #{tpu_custom_call.1}
  #allocation0 [shape = 'u32[]', space=smem, size = 0x4, offset = 0x4, fixed_abs, tag = 'smem constant byte address 0x4 - core index']
  #allocation1 [shape = 'u32[144,128]{1,0:T(1,128)}', space=vmem, size = 0x12000, scoped, tag = 'internal scratch']
  #allocation2 [shape = 'f32[8,128]{1,0:T(8,128)}', space=vmem, size = 0x1000, scoped, tag = 'scratch operand']
  %s0 = inlined_call_operand.hbm [shape: bf16[8,128], index: 0, kind: input, shape index: {}]
  %s1 = inlined_call_operand.hbm [shape: bf16[128,128], index: 1, kind: input, shape index: {}]
  %s2 = inlined_call_operand.hbm [shape: bf16[128,128], index: 2, kind: input, shape index: {}]
  %s3 = inlined_call_operand.vmem [shape: bf16[1,128], index: 3, kind: input, shape index: {}]
  %s4 = inlined_call_operand.vmem [shape: f32[1,128], index: 4, kind: input, shape index: {}]
  %s5 = inlined_call_operand.hbm [shape: f32[8,128], index: 5, kind: output, shape index: {}]
  %s6 = sld [smem:[#allocation0]]
  $region50: #{tpu_custom_call.1} parent=0
    _
  %s8 = ssub.s32 1, %s6
  %s9 = scalar_select 0, %s8, %s6
  $region1: #{tpu_custom_call.1} parent=0
    #allocation3 [shape = 'u8[2048]{0}', space=vmem, size = 0x800, scoped, tag = 'input window, operand 0, single buffered']
    #allocation4 [shape = 's32[1]{0}', space=sflag, size = 0x4, scoped, tag = 'scoped memory for tpu_custom_call.1']
    #allocation5 [shape = 's32[1]{0}', space=sflag, size = 0x4, scoped, tag = 'scoped memory for tpu_custom_call.1']
    #allocation6 [shape = 'u8[32768]{0}', space=vmem, size = 0x8000, scoped, tag = 'input window, operand 1, single buffered']
    #allocation7 [shape = 's32[1]{0}', space=sflag, size = 0x4, scoped, tag = 'scoped memory for tpu_custom_call.1']
    #allocation8 [shape = 'u8[32768]{0}', space=vmem, size = 0x8000, scoped, tag = 'input window, operand 2, single buffered']
    #allocation9 [shape = 'u8[4096]{0}', space=vmem, size = 0x1000, scoped, tag = 'output window, operand 0, single buffered']
    %10 = vsyncpa [#allocation4], 0
    %11 = vsyncpa [#allocation7], 0
    %12 = vsyncpa [#allocation5], 0
    // Predicated region
    $region2: #{tpu_custom_call.1} parent=1 // pred_check
      _
    $region3: #{tpu_custom_call.1} parent=1 // pred_check_branch
      %14 = sbr.rel (0) target = $region5
    $region4: #{tpu_custom_call.1} parent=1 // pred_region
      %s16 = ssub.s32 64, 64
      %17 = vsyncadd [#allocation4], %s16
      %s19 = sshll.u32 [#allocation3], 4
      %s20 = int_to_ptr.vmem [resolvable:$true] %s19
      %22 = dma.hbm_to_vmem [thread:$0]  %s0, 64, %s20, [#allocation4]
    $region5: #{tpu_custom_call.1} parent=1 // pred_fallthru
      _
    // Predicated region
    $region6: #{tpu_custom_call.1} parent=1 // pred_check
      _
    $region7: #{tpu_custom_call.1} parent=1 // pred_check_branch
      %24 = sbr.rel (0) target = $region9
    $region8: #{tpu_custom_call.1} parent=1 // pred_region
      %s26 = ssub.s32 1024, 1024
      %27 = vsyncadd [#allocation7], %s26
      %s28 = sshll.u32 [#allocation6], 4
      %s29 = int_to_ptr.vmem [resolvable:$true] %s28
      %34 = dma.hbm_to_vmem [thread:$0]  %s1, 1024, %s29, [#allocation7], 64, 64, 4
    $region9: #{tpu_custom_call.1} parent=1 // pred_fallthru
      _
    // Predicated region
    $region10: #{tpu_custom_call.1} parent=1 // pred_check
      _
    $region11: #{tpu_custom_call.1} parent=1 // pred_check_branch
      %36 = sbr.rel (0) target = $region13
    $region12: #{tpu_custom_call.1} parent=1 // pred_region
      %s38 = ssub.s32 1024, 1024
      %39 = vsyncadd [#allocation7], %s38
      %s40 = sshll.u32 [#allocation8], 4
      %s41 = int_to_ptr.vmem [resolvable:$true] %s40
      %46 = dma.hbm_to_vmem [thread:$0]  %s2, 1024, %s41, [#allocation7], 64, 64, 4
    $region13: #{tpu_custom_call.1} parent=1 // pred_fallthru
      _
    // Predicated region
    $region14: #{tpu_custom_call.1} parent=1 // pred_check
      _
    $region15: #{tpu_custom_call.1} parent=1 // pred_check_branch
      %48 = sbr.rel (0) target = $region17
    $region16: #{tpu_custom_call.1} parent=1 // pred_region
      _
    $region17: #{tpu_custom_call.1} parent=1 // pred_fallthru
      _
    // Predicated region
    $region18: #{tpu_custom_call.1} parent=1 // pred_check
      _
    $region19: #{tpu_custom_call.1} parent=1 // pred_check_branch
      %50 = sbr.rel (0) target = $region21
    $region20: #{tpu_custom_call.1} parent=1 // pred_region
      _
    $region21: #{tpu_custom_call.1} parent=1 // pred_fallthru
      _
    // Predicated region
    $region22: #{tpu_custom_call.1} parent=1 // pred_check
      _
    $region23: #{tpu_custom_call.1} parent=1 // pred_check_branch
      %52 = sbr.rel (0) target = $region25
    $region24: #{tpu_custom_call.1} parent=1 // pred_region
      %53 = dma.done [#allocation4], 64
    $region25: #{tpu_custom_call.1} parent=1 // pred_fallthru
      _
    // Predicated region
    $region26: #{tpu_custom_call.1} parent=1 // pred_check
      _
    $region27: #{tpu_custom_call.1} parent=1 // pred_check_branch
      %55 = sbr.rel (0) target = $region29
    $region28: #{tpu_custom_call.1} parent=1 // pred_region
      %56 = dma.done [#allocation7], 1024
    $region29: #{tpu_custom_call.1} parent=1 // pred_fallthru
      _
    // Predicated region
    $region30: #{tpu_custom_call.1} parent=1 // pred_check
      _
    $region31: #{tpu_custom_call.1} parent=1 // pred_check_branch
      %58 = sbr.rel (0) target = $region33
    $region32: #{tpu_custom_call.1} parent=1 // pred_region
      %59 = dma.done [#allocation7], 1024
    $region33: #{tpu_custom_call.1} parent=1 // pred_fallthru
      _
    %p61 = scmp.eq.s32.totalorder 0, 0
    // Predicated region
    $region34: #{tpu_custom_call.1} parent=1 // pred_check
      %p62 = pneg %p61
    $region35: #{tpu_custom_call.1} parent=1 // pred_check_branch
      %64 = sbr.rel (%p62) target = $region37
    $region36: #{tpu_custom_call.1} parent=1 // pred_region
      %65 = vst [vmem:[#allocation2] sm:$0xff] 0.0
    $region37: #{tpu_custom_call.1} parent=1 // pred_fallthru
      _
    %v66 = vld [vmem:[#allocation6] sm:$0xf]
    %v67 = vld [vmem:[#allocation6 + $0x4] sm:$0xf]
    %v68 = vld [vmem:[#allocation6 + $0x8] sm:$0xf]
    %v69 = vld [vmem:[#allocation6 + $0xc] sm:$0xf]
    %v70 = vld [vmem:[#allocation6 + $0x10] sm:$0xf]
    %v71 = vld [vmem:[#allocation6 + $0x14] sm:$0xf]
    %v72 = vld [vmem:[#allocation6 + $0x18] sm:$0xf]
    %v73 = vld [vmem:[#allocation6 + $0x1c] sm:$0xf]
    %v74 = vld [vmem:[#allocation6 + $0x20] sm:$0xf]
    %v75 = vld [vmem:[#allocation6 + $0x24] sm:$0xf]
    %v76 = vld [vmem:[#allocation6 + $0x28] sm:$0xf]
    %v77 = vld [vmem:[#allocation6 + $0x2c] sm:$0xf]
    %v78 = vld [vmem:[#allocation6 + $0x30] sm:$0xf]
    %v79 = vld [vmem:[#allocation6 + $0x34] sm:$0xf]
    %v80 = vld [vmem:[#allocation6 + $0x38] sm:$0xf]
    %v81 = vld [vmem:[#allocation6 + $0x3c] sm:$0xf]
    %v82 = vld [vmem:[#allocation8] sm:$0xf]
    %v83 = vld [vmem:[#allocation8 + $0x4] sm:$0xf]
    %v84 = vld [vmem:[#allocation8 + $0x8] sm:$0xf]
    %v85 = vld [vmem:[#allocation8 + $0xc] sm:$0xf]
    %v86 = vld [vmem:[#allocation8 + $0x10] sm:$0xf]
    %v87 = vld [vmem:[#allocation8 + $0x14] sm:$0xf]
    %v88 = vld [vmem:[#allocation8 + $0x18] sm:$0xf]
    %v89 = vld [vmem:[#allocation8 + $0x1c] sm:$0xf]
    %v90 = vld [vmem:[#allocation8 + $0x20] sm:$0xf]
    %v91 = vld [vmem:[#allocation8 + $0x24] sm:$0xf]
    %v92 = vld [vmem:[#allocation8 + $0x28] sm:$0xf]
    %v93 = vld [vmem:[#allocation8 + $0x2c] sm:$0xf]
    %v94 = vld [vmem:[#allocation8 + $0x30] sm:$0xf]
    %v95 = vld [vmem:[#allocation8 + $0x34] sm:$0xf]
    %v96 = vld [vmem:[#allocation8 + $0x38] sm:$0xf]
    %v97 = vld [vmem:[#allocation8 + $0x3c] sm:$0xf]
    %v98 = vld [vmem:[%s3] sm:$0x1]
    %v100 = vpack.i.b16 %v98, %v98
    %v102 = vlaneseq
    %v103 = vshrl.u32 %v102, 7
    %v104 = vsub.s32 0, %v103
    %v105 = vrot.slane %v100, %v104
    %v107 = vunpack.c.l.b16 %v105
    %v108 = vpack.c.b16 %v107, %v107
    %v110 = vmul.bf16 %v82, %v108
    %v111 = vmul.bf16 %v83, %v108
    %v112 = vmul.bf16 %v84, %v108
    %v113 = vmul.bf16 %v85, %v108
    %v114 = vmul.bf16 %v86, %v108
    %v115 = vmul.bf16 %v87, %v108
    %v116 = vmul.bf16 %v88, %v108
    %v117 = vmul.bf16 %v89, %v108
    %v118 = vmul.bf16 %v90, %v108
    %v119 = vmul.bf16 %v91, %v108
    %v120 = vmul.bf16 %v92, %v108
    %v121 = vmul.bf16 %v93, %v108
    %v122 = vmul.bf16 %v94, %v108
    %v123 = vmul.bf16 %v95, %v108
    %v124 = vmul.bf16 %v96, %v108
    %v125 = vmul.bf16 %v97, %v108
    %v126 = vadd.bf16 %v66, %v110
    %v127 = vadd.bf16 %v67, %v111
    %v128 = vadd.bf16 %v68, %v112
    %v129 = vadd.bf16 %v69, %v113
    %v130 = vadd.bf16 %v70, %v114
    %v131 = vadd.bf16 %v71, %v115
    %v132 = vadd.bf16 %v72, %v116
    %v133 = vadd.bf16 %v73, %v117
    %v134 = vadd.bf16 %v74, %v118
    %v135 = vadd.bf16 %v75, %v119
    %v136 = vadd.bf16 %v76, %v120
    %v137 = vadd.bf16 %v77, %v121
    %v138 = vadd.bf16 %v78, %v122
    %v139 = vadd.bf16 %v79, %v123
    %v140 = vadd.bf16 %v80, %v124
    %v141 = vadd.bf16 %v81, %v125
    %v142 = vld [vmem:[#allocation2] sm:$0xff]
    %v143 = vld [vmem:[#allocation3] sm:$0xf]
    %v160 = vunpack.c.l.b16 %v126
    %v161 = vunpack.c.l.b16 %v127
    %v162 = vunpack.c.l.b16 %v128
    %v163 = vunpack.c.l.b16 %v129
    %v164 = vunpack.c.l.b16 %v130
    %v165 = vunpack.c.l.b16 %v131
    %v166 = vunpack.c.l.b16 %v132
    %v167 = vunpack.c.l.b16 %v133
    %v168 = vunpack.c.l.b16 %v134
    %v169 = vunpack.c.l.b16 %v135
    %v170 = vunpack.c.l.b16 %v136
    %v171 = vunpack.c.l.b16 %v137
    %v172 = vunpack.c.l.b16 %v138
    %v173 = vunpack.c.l.b16 %v139
    %v174 = vunpack.c.l.b16 %v140
    %v175 = vunpack.c.l.b16 %v141
    %v176 = vpack.c.b16 %v161, %v160
    %v177 = vpack.c.b16 %v163, %v162
    %v178 = vpack.c.b16 %v165, %v164
    %v179 = vpack.c.b16 %v167, %v166
    %v180 = vpack.c.b16 %v169, %v168
    %v181 = vpack.c.b16 %v171, %v170
    %v182 = vpack.c.b16 %v173, %v172
    %v183 = vpack.c.b16 %v175, %v174
    %192 = vmatprep.subr.bf16.mxu0 0
    %193 = vmatpush1.bf16.msra.mxu0 %v183
    %194 = vmatprep.subr.bf16.mxu0 0
    %195 = vmatpush1.bf16.msra.mxu0 %v182
    %196 = vmatprep.subr.bf16.mxu0 0
    %197 = vmatpush1.bf16.msra.mxu0 %v181
    %198 = vmatprep.subr.bf16.mxu0 0
    %199 = vmatpush1.bf16.msra.mxu0 %v180
    %200 = vmatprep.subr.bf16.mxu0 0
    %201 = vmatpush1.bf16.msra.mxu0 %v179
    %202 = vmatprep.subr.bf16.mxu0 0
    %203 = vmatpush1.bf16.msra.mxu0 %v178
    %204 = vmatprep.subr.bf16.mxu0 0
    %205 = vmatpush1.bf16.msra.mxu0 %v177
    %206 = vmatprep.subr.bf16.mxu0 0
    %207 = vmatpush1.bf16.msra.mxu0 %v176
    %208 = vmatprep.subr.bf16.mxu0 0
    %209 = vmatpush2.bf16.msra.mxu0 0
    %210 = vmatprep.subr.bf16.mxu0 0
    %211 = vmatpush2.bf16.msra.mxu0 0
    %212 = vmatprep.subr.bf16.mxu0 0
    %213 = vmatpush2.bf16.msra.mxu0 0
    %214 = vmatprep.subr.bf16.mxu0 0
    %215 = vmatpush2.bf16.msra.mxu0 0
    %216 = vmatprep.subr.bf16.mxu0 0
    %217 = vmatpush2.bf16.msra.mxu0 0
    %218 = vmatprep.subr.bf16.mxu0 0
    %219 = vmatpush2.bf16.msra.mxu0 0
    %220 = vmatprep.subr.bf16.mxu0 0
    %221 = vmatpush2.bf16.msra.mxu0 0
    %222 = vmatprep.subr.bf16.mxu0 0
    %223 = vmatpush2.bf16.msra.mxu0 0
    %224 = vmatprep.mubr.bf16.mxu0 0
    %225 = vmatmul.mubr.bf16.gmra.mxu0 %v143
    %v226 = vpop.f32.mrf.mxu0
    %v227 = vadd.f32 0.0, %v226
    %v228 = vpop.f32.mrf.mxu0
    %v229 = vpop.f32.mrf.mxu0
    %v230 = vpop.f32.mrf.mxu0
    %231 = vdwg.mxu0
    %v232 = vadd.f32 %v142, %v227
    %233 = vst [vmem:[#allocation2] sm:$0xff] %v232
    // Predicated region
    $region38: #{tpu_custom_call.1} parent=1 // pred_check
      %p234 = pneg %p61
    $region39: #{tpu_custom_call.1} parent=1 // pred_check_branch
      %236 = sbr.rel (%p234) target = $region41
    $region40: #{tpu_custom_call.1} parent=1 // pred_region
      %v237 = vld [vmem:[#allocation2] sm:$0xff]
      %v238 = vld [vmem:[%s4] sm:$0x1]
      %v240 = vlaneseq
      %v241 = vshrl.u32 %v240, 7
      %v242 = vsub.s32 0, %v241
      %v243 = vrot.slane %v238, %v242
      %v245 = vadd.f32 %v237, %v243
      %246 = vst [vmem:[#allocation9] sm:$0xff] %v245
    $region41: #{tpu_custom_call.1} parent=1 // pred_fallthru
      _
    // Predicated region
    $region42: #{tpu_custom_call.1} parent=1 // pred_check
      _
    $region43: #{tpu_custom_call.1} parent=1 // pred_check_branch
      %248 = sbr.rel (0) target = $region45
    $region44: #{tpu_custom_call.1} parent=1 // pred_region
      %s250 = ssub.s32 128, 128
      %251 = vsyncadd [#allocation5], %s250
      %s253 = sshll.u32 [#allocation9], 4
      %s254 = int_to_ptr.vmem [resolvable:$true] %s253
      %256 = dma.vmem_to_hbm [thread:$0]  %s254, 128, %s5, [#allocation5]
    $region45: #{tpu_custom_call.1} parent=1 // pred_fallthru
      _
    // Predicated region
    $region46: #{tpu_custom_call.1} parent=1 // pred_check
      _
    $region47: #{tpu_custom_call.1} parent=1 // pred_check_branch
      %258 = sbr.rel (0) target = $region49
    $region48: #{tpu_custom_call.1} parent=1 // pred_region
      %259 = dma.done [#allocation5], 128
    $region49: #{tpu_custom_call.1} parent=1 // pred_fallthru
      _
    %260 = vsyncpa [#allocation4], 1
    %261 = vsyncpa [#allocation7], 1
    %262 = vsyncpa [#allocation5], 1

</llo_original>
